<compile_context>
chip_gen: v6e
topology: v6e:2x2x1
jax: 0.10.0
libtpu: 0.0.40
codegen_flags: <defaults>
</compile_context>

<pallas_src>
import functools

import jax
import jax.numpy as jnp
import numpy as np
from jax.experimental import pallas as pl
from jax.experimental.pallas import tpu as pltpu

V_TH = 1.0  # SpikingModule.v_th


def _round_up(x, m):
    return (x + m - 1) // m * m


def _geometry(H, W, KH, KW, stride, padding):
    sh, sw = stride
    ph, pw = padding
    Hp, Wp = H + 2 * ph, W + 2 * pw
    Ho = (Hp - KH) // sh + 1
    Wo = (Wp - KW) // sw + 1
    Lout = _round_up(Ho * Wp, 128)                            # lane-dense output len / image
    Lpad = _round_up((KH - 1) * Wp + (KW - 1) + Lout, 128)    # shifted slices stay in bounds
    return Ho, Wo, Hp, Wp, Lout, Lpad


def _vmem_limit_bytes():
    """<=32 MiB on v7x (64 MiB physical VMEM), 64 MiB on v5e/v6e (128 MiB physical)."""
    try:
        cap = int(pltpu.get_tpu_info().vmem_capacity_bytes)
    except Exception:
        return 32 * 1024 * 1024
    return max(32 * 1024 * 1024, min(96 * 1024 * 1024, cap // 2))


def _pick_block_batch(B, C_in, C_out, KH, KW, Lpad, Lout, budget_bytes):
    """Largest batch block (divisor of B, capped at 8) whose per-step footprint fits the
    budget, preferring >= 2 grid steps so v7x's two TensorCores both get work."""
    per_img = (2 * (C_in * Lpad * 2)            # x bf16, double buffered
               + 2 * (C_out * Lout * 4)         # v (in) f32, double buffered
               + 2 * (C_out * Lout * 4)         # new_v f32
               + 2 * (C_out * Lout * 2)         # new_out bf16
               + KH * KW * C_in * Lout * 2)     # im2col scratch
    best = 1
    for bb in range(1, min(B, 8) + 1):
        if B % bb or bb * per_img > budget_bytes:
            continue
        if B // bb < 2 and bb != 1:
            continue
        best = bb
    return best


# ---------------------------------------------------------------------------
# Pallas kernel: im2col into a VMEM scratch + ONE fused MXU matmul + LIF update
# ---------------------------------------------------------------------------
def _spiking_conv_kernel(shifts, c_in, bb, l_out, v_th, neg_th, inv_alpha,
                         x_ref, w_ref, b_ref, v_ref, new_v_ref, new_out_ref, col_ref):
    """Refs:
         x_ref       : (Bb, C_in, Lpad)        bf16  flattened zero-padded images
         w_ref       : (C_out, KH*KW*C_in)     bf16  resident across the grid
         b_ref       : (C_out, 1)              f32   resident across the grid
         v_ref       : (C_out, Bb*Lout)        f32   membrane (aliased with new_v)
         new_v_ref   : (C_out, Bb*Lout)        f32
         new_out_ref : (C_out, Bb*Lout)        bf16  bipolar spikes
         col_ref     : (KH*KW*C_in, Bb*Lout)   bf16  VMEM im2col scratch
    """
    # Stack the KH*KW shifted taps once per image into the im2col scratch
    # (one lane relayout per tap instead of one tiny matmul + f32 accumulate per tap).
    for b in range(bb):
        xb = x_ref[b]                                           # (C_in, Lpad)
        for k, s in enumerate(shifts):                          # static unroll
            col_ref[k * c_in:(k + 1) * c_in, b * l_out:(b + 1) * l_out] = xb[:, s:s + l_out]

    # One fused matmul: K = KH*KW*C_in, N = Bb*Lout, f32 accumulation on the MXU.
    conv = jnp.dot(w_ref[...], col_ref[...], preferred_element_type=jnp.float32)

    v = v_ref[...] + conv + b_ref[...]                          # self.v += conv(x) + bias
    plus = (v >= v_th).astype(jnp.float32)                      # (v >= v_th).float()
    if inv_alpha is not None:
        minus = (v <= neg_th).astype(jnp.float32)               # (v <= -v_th/alpha).float()
        new_v_ref[...] = v - plus + minus * inv_alpha           # v - plus + minus/alpha
        new_out_ref[...] = (plus - minus).astype(new_out_ref.dtype)
    else:
        new_v_ref[...] = v - plus
        new_out_ref[...] = plus.astype(new_out_ref.dtype)


# ---------------------------------------------------------------------------
# Functional forward (state kept in the kernel's lane-dense layout across steps)
# ---------------------------------------------------------------------------
def spiking_conv_forward(x, v_kern, out_kern, spikecount, weight, bias,
                         stride=(1, 1), padding=(1, 1), alpha=0.01):
    """SpikingConv.forward (inputs_float=False path). Returns
    (prev_out_kern, new_v_kern, new_out_kern, new_spikecount). State is in the kernel
    layout (C_out, B*Lout): v f32, out bf16. Convert with kernel_state_to_nchw."""
    # TODO(synk): inputs_float=True branch is pure Python scalar MAC/energy bookkeeping
    # (no tensor compute); only the inputs_float=False path is implemented here.
    # TODO(synk): the implicit-GEMM shift trick assumes stride == (1, 1).
    # TODO(synk): ideally the producing layer emits spikes directly in the (B, C_in, Lpad)
    # bf16 layout so even the single pad/cast pass below disappears.
    assert tuple(stride) == (1, 1), "only stride (1,1) supported by this kernel"

    B, C_in, H, W = x.shape
    C_out, _, KH, KW = weight.shape
    ph, pw = padding
    Ho, Wo, Hp, Wp, Lout, Lpad = _geometry(H, W, KH, KW, stride, padding)
    K = KH * KW * C_in

    # --- single-pass input prep: one pad (spatial + extra bottom rows), reshape, slice, cast
    extra_rows = (max(0, Lpad - Hp * Wp) + Wp - 1) // Wp
    xp = jnp.pad(x, ((0, 0), (0, 0), (ph, ph + extra_rows), (pw, pw)))
    xf = xp.reshape(B, C_in, (Hp + extra_rows) * Wp)[:, :, :Lpad].astype(jnp.bfloat16)

    # weight OIHW -> (C_out, KH*KW*C_in) bf16 (row order k*C_in + c); bias -> (C_out, 1) f32.
    w2 = jnp.transpose(weight, (0, 2, 3, 1)).reshape(C_out, K).astype(jnp.bfloat16)
    b_k = bias.reshape(C_out, 1).astype(jnp.float32)

    vmem_limit = _vmem_limit_bytes()
    Bb = _pick_block_batch(B, C_in, C_out, KH, KW, Lpad, Lout, (vmem_limit * 3) // 4)
    n_blocks = B // Bb

    shifts = tuple(ki * Wp + kj for ki in range(KH) for kj in range(KW))
    if alpha is None:
        neg_th, inv_alpha = None, None
    else:
        neg_th = float(-V_TH / alpha)                            # -v_th / alpha
        inv_alpha = float(np.float32(1.0) / np.float32(alpha))   # torch's f32 minus/alpha
    kernel = functools.partial(_spiking_conv_kernel, shifts, C_in, Bb, Lout,
                               float(V_TH), neg_th, inv_alpha)

    flops = 2 * B * C_out * K * Lout
    bytes_accessed = (B * C_in * Lpad * 2 + C_out * K * 2 + C_out * 4
                      + B * C_out * Lout * (4 + 4 + 2))

    new_v, new_out = pl.pallas_call(
        kernel,
        out_shape=(jax.ShapeDtypeStruct((C_out, B * Lout), jnp.float32),
                   jax.ShapeDtypeStruct((C_out, B * Lout), jnp.bfloat16)),
        grid_spec=pltpu.PrefetchScalarGridSpec(
            num_scalar_prefetch=0,
            grid=(n_blocks,),
            in_specs=[
                pl.BlockSpec((Bb, C_in, Lpad), lambda i: (i, 0, 0)),       # images
                pl.BlockSpec((C_out, K), lambda i: (0, 0)),                # weights (resident)
                pl.BlockSpec((C_out, 1), lambda i: (0, 0)),                # bias (resident)
                pl.BlockSpec((C_out, Bb * Lout), lambda i: (0, i)),        # membrane v
            ],
            out_specs=(
                pl.BlockSpec((C_out, Bb * Lout), lambda i: (0, i)),        # new v (aliased)
                pl.BlockSpec((C_out, Bb * Lout), lambda i: (0, i)),        # new spikes (bf16)
            ),
            scratch_shapes=[pltpu.VMEM((K, Bb * Lout), jnp.bfloat16)]),    # im2col scratch
        compiler_params=pltpu.CompilerParams(
            dimension_semantics=("parallel",),          # batch blocks shard over v7x's 2 TCs
            vmem_limit_bytes=vmem_limit),
        cost_estimate=pl.CostEstimate(flops=flops, transcendentals=0,
                                      bytes_accessed=bytes_accessed),
        input_output_aliases={3: 0},                    # v_kern updated in place -> new_v
    )(xf, w2, b_k, v_kern)

    # spikecount += sum(|x|) : plain XLA reduction (inputs_float=False branch).
    new_spikecount = spikecount + jnp.sum(jnp.abs(x.astype(jnp.float32)))
    prev = out_kern                                     # prev = self.out.clone()
    return prev, new_v, new_out, new_spikecount


def kernel_state_zeros(B, C_out, Ho, Wp, init_mem=0.0):
    """State after reset(): v = init_mem (f32), out = 0 (bf16), in kernel layout."""
    Lout = _round_up(Ho * Wp, 128)
    v = jnp.full((C_out, B * Lout), init_mem, jnp.float32)
    out = jnp.zeros((C_out, B * Lout), jnp.bfloat16)
    return v, out


def kernel_state_to_nchw(s, B, Ho, Wo, Wp):
    """Kernel layout (C_out, B*Lout) -> NCHW (B, C_out, Ho, Wo) f32 at the model boundary.
    Note: dead lanes (cols Wo..Wp-1 and the 128-roundup tail) are dropped here; any
    reduction over kernel-layout arrays must mask them the same way."""
    C_out = s.shape[0]
    Lout = s.shape[1] // B
    s = jnp.transpose(s.reshape(C_out, B, Lout), (1, 0, 2))
    return s[:, :, :Ho * Wp].reshape(B, C_out, Ho, Wp)[:, :, :, :Wo].astype(jnp.float32)


# ---------------------------------------------------------------------------
# Pure-JAX reference mirroring the PyTorch semantics (for correctness checking)
# ---------------------------------------------------------------------------
def _reference_step(x, v, out_state, spikecount, weight, bias, stride, padding, alpha):
    conv = jax.lax.conv_general_dilated(
        x, weight, window_strides=stride,
        padding=[(padding[0], padding[0]), (padding[1], padding[1])],
        dimension_numbers=("NCHW", "OIHW", "NCHW"))
    conv = conv + bias.reshape(1, -1, 1, 1)
    v2 = v + conv
    plus = (v2 >= V_TH).astype(jnp.float32)
    minus = (v2 <= -V_TH / alpha).astype(jnp.float32)
    new_v = v2 - plus + minus / alpha
    new_out = plus - minus
    return out_state, new_v, new_out, spikecount + jnp.sum(jnp.abs(x))


# ---------------------------------------------------------------------------
if __name__ == "__main__":
    key = jax.random.PRNGKey(0)
    k_x, k_x2, k_w, k_b = jax.random.split(key, 4)

    # Small shapes: batch=2, C_in=4, H=W=16, C_out=8, 3x3 conv, stride 1, pad 1.
    B, C_in, H, W = 2, 4, 16, 16
    C_out, KH, KW = 8, 3, 3
    stride, padding, alpha = (1, 1), (1, 1), 0.01     # LeakyReLU negative_slope default

    weight = (0.1 * jax.random.normal(k_w, (C_out, C_in, KH, KW))).astype(jnp.float32)
    bias = (0.1 * jax.random.normal(k_b, (C_out,))).astype(jnp.float32)

    # Binary spike inputs (inputs_float=False regime).
    x1 = jax.random.bernoulli(k_x, 0.5, (B, C_in, H, W)).astype(jnp.float32)
    x2 = jax.random.bernoulli(k_x2, 0.5, (B, C_in, H, W)).astype(jnp.float32)

    Ho, Wo, Hp, Wp, Lout, Lpad = _geometry(H, W, KH, KW, stride, padding)

    # Recurrent state lives in the kernel's lane-dense layout across timesteps.
    v_kern, out_kern = kernel_state_zeros(B, C_out, Ho, Wp)
    spikecount = jnp.float32(0.0)

    # Reference uses the same bf16-rounded weights the kernel feeds the MXU (f32 accumulation
    # on both sides), so spike outputs stay threshold-exact and v matches to f32 noise.
    weight_q = weight.astype(jnp.bfloat16).astype(jnp.float32)
    v_r = jnp.zeros((B, C_out, Ho, Wo), jnp.float32)
    out_r = jnp.zeros((B, C_out, Ho, Wo), jnp.float32)
    sc_r = jnp.float32(0.0)

    fwd = jax.jit(spiking_conv_forward, static_argnames=("stride", "padding", "alpha"),
                  donate_argnums=(1,))                 # donate v_kern -> true in-place update

    # Two timesteps to exercise the recurrent membrane state.
    for x in (x1, x2):
        prev_k, v_kern, out_kern, spikecount = fwd(
            x, v_kern, out_kern, spikecount, weight, bias,
            stride=stride, padding=padding, alpha=alpha)
        prev_r, v_r, out_r, sc_r = _reference_step(
            x, v_r, out_r, sc_r, weight_q, bias, stride, padding, alpha)

        jax.block_until_ready((prev_k, v_kern, out_kern, spikecount))

        np.testing.assert_allclose(np.asarray(kernel_state_to_nchw(prev_k, B, Ho, Wo, Wp)),
                                   np.asarray(prev_r), atol=1e-5)
        np.testing.assert_allclose(np.asarray(kernel_state_to_nchw(v_kern, B, Ho, Wo, Wp)),
                                   np.asarray(v_r), atol=1e-4)
        np.testing.assert_allclose(np.asarray(kernel_state_to_nchw(out_kern, B, Ho, Wo, Wp)),
                                   np.asarray(out_r), atol=1e-5)
        np.testing.assert_allclose(float(spikecount), float(sc_r), rtol=1e-6)

    print("KERNEL_OK")
</pallas_src>

<mosaic_0001>
module attributes {stable_mosaic.version = 11 : i64} {
  func.func @_spiking_conv_kernel(%arg0: i32, %arg1: memref<1x4x512xbf16, #tpu.memory_space<vmem>>, %arg2: memref<8x36xbf16, #tpu.memory_space<vmem>>, %arg3: memref<8x1xf32, #tpu.memory_space<vmem>>, %arg4: memref<8x384xf32, #tpu.memory_space<vmem>>, %arg5: memref<8x384xf32, #tpu.memory_space<vmem>>, %arg6: memref<8x384xbf16, #tpu.memory_space<vmem>>, %arg7: memref<36x384xbf16, #tpu.memory_space<vmem>>) attributes {dimension_semantics = [#tpu.dimension_semantics<parallel>], iteration_bounds = array<i64: 2>, scalar_prefetch = 0 : i64, scratch_operands = 1 : i64, tpu.core_type = #tpu.core_type<tc>, window_params = [{transform_indices = @transform_0, window_bounds = array<i64: 1, 4, 512>}, {pipeline_mode = #tpu.pipeline_mode<synchronous>, transform_indices = @transform_1, window_bounds = array<i64: 8, 36>}, {pipeline_mode = #tpu.pipeline_mode<synchronous>, transform_indices = @transform_2, window_bounds = array<i64: 8, 1>}, {transform_indices = @transform_3, window_bounds = array<i64: 8, 384>}, {transform_indices = @transform_4, window_bounds = array<i64: 8, 384>}, {transform_indices = @transform_5, window_bounds = array<i64: 8, 384>}]} {
    %c0 = arith.constant 0 : index
    %c0_0 = arith.constant 0 : index
    %c0_1 = arith.constant 0 : index
    %0 = vector.load %arg1[%c0, %c0_0, %c0_1] : memref<1x4x512xbf16, #tpu.memory_space<vmem>>, vector<1x4x512xbf16>
    %1 = vector.shape_cast %0 : vector<1x4x512xbf16> to vector<4x512xbf16>
    %2 = vector.extract_strided_slice %1 {offsets = [0, 0], sizes = [4, 384], strides = [1, 1]} : vector<4x512xbf16> to vector<4x384xbf16>
    %c0_2 = arith.constant 0 : index
    %c0_3 = arith.constant 0 : index
    %3 = vector.load %arg7[%c0_2, %c0_3] : memref<36x384xbf16, #tpu.memory_space<vmem>>, vector<4x384xbf16>
    tpu.vector_store %arg7[%c0_2, %c0_3], %2 {strides = array<i32>} : memref<36x384xbf16, #tpu.memory_space<vmem>>, vector<4x384xbf16>,
    %4 = vector.extract_strided_slice %1 {offsets = [0, 1], sizes = [4, 384], strides = [1, 1]} : vector<4x512xbf16> to vector<4x384xbf16>
    %c4 = arith.constant 4 : index
    %c0_4 = arith.constant 0 : index
    %5 = vector.load %arg7[%c4, %c0_4] : memref<36x384xbf16, #tpu.memory_space<vmem>>, vector<4x384xbf16>
    tpu.vector_store %arg7[%c4, %c0_4], %4 {strides = array<i32>} : memref<36x384xbf16, #tpu.memory_space<vmem>>, vector<4x384xbf16>,
    %6 = vector.extract_strided_slice %1 {offsets = [0, 2], sizes = [4, 384], strides = [1, 1]} : vector<4x512xbf16> to vector<4x384xbf16>
    %c8 = arith.constant 8 : index
    %c0_5 = arith.constant 0 : index
    %7 = vector.load %arg7[%c8, %c0_5] : memref<36x384xbf16, #tpu.memory_space<vmem>>, vector<4x384xbf16>
    tpu.vector_store %arg7[%c8, %c0_5], %6 {strides = array<i32>} : memref<36x384xbf16, #tpu.memory_space<vmem>>, vector<4x384xbf16>,
    %8 = vector.extract_strided_slice %1 {offsets = [0, 18], sizes = [4, 384], strides = [1, 1]} : vector<4x512xbf16> to vector<4x384xbf16>
    %c12 = arith.constant 12 : index
    %c0_6 = arith.constant 0 : index
    %9 = vector.load %arg7[%c12, %c0_6] : memref<36x384xbf16, #tpu.memory_space<vmem>>, vector<4x384xbf16>
    tpu.vector_store %arg7[%c12, %c0_6], %8 {strides = array<i32>} : memref<36x384xbf16, #tpu.memory_space<vmem>>, vector<4x384xbf16>,
    %10 = vector.extract_strided_slice %1 {offsets = [0, 19], sizes = [4, 384], strides = [1, 1]} : vector<4x512xbf16> to vector<4x384xbf16>
    %c16 = arith.constant 16 : index
    %c0_7 = arith.constant 0 : index
    %11 = vector.load %arg7[%c16, %c0_7] : memref<36x384xbf16, #tpu.memory_space<vmem>>, vector<4x384xbf16>
    tpu.vector_store %arg7[%c16, %c0_7], %10 {strides = array<i32>} : memref<36x384xbf16, #tpu.memory_space<vmem>>, vector<4x384xbf16>,
    %12 = vector.extract_strided_slice %1 {offsets = [0, 20], sizes = [4, 384], strides = [1, 1]} : vector<4x512xbf16> to vector<4x384xbf16>
    %c20 = arith.constant 20 : index
    %c0_8 = arith.constant 0 : index
    %13 = vector.load %arg7[%c20, %c0_8] : memref<36x384xbf16, #tpu.memory_space<vmem>>, vector<4x384xbf16>
    tpu.vector_store %arg7[%c20, %c0_8], %12 {strides = array<i32>} : memref<36x384xbf16, #tpu.memory_space<vmem>>, vector<4x384xbf16>,
    %14 = vector.extract_strided_slice %1 {offsets = [0, 36], sizes = [4, 384], strides = [1, 1]} : vector<4x512xbf16> to vector<4x384xbf16>
    %c24 = arith.constant 24 : index
    %c0_9 = arith.constant 0 : index
    %15 = vector.load %arg7[%c24, %c0_9] : memref<36x384xbf16, #tpu.memory_space<vmem>>, vector<4x384xbf16>
    tpu.vector_store %arg7[%c24, %c0_9], %14 {strides = array<i32>} : memref<36x384xbf16, #tpu.memory_space<vmem>>, vector<4x384xbf16>,
    %16 = vector.extract_strided_slice %1 {offsets = [0, 37], sizes = [4, 384], strides = [1, 1]} : vector<4x512xbf16> to vector<4x384xbf16>
    %c28 = arith.constant 28 : index
    %c0_10 = arith.constant 0 : index
    %17 = vector.load %arg7[%c28, %c0_10] : memref<36x384xbf16, #tpu.memory_space<vmem>>, vector<4x384xbf16>
    tpu.vector_store %arg7[%c28, %c0_10], %16 {strides = array<i32>} : memref<36x384xbf16, #tpu.memory_space<vmem>>, vector<4x384xbf16>,
    %18 = vector.extract_strided_slice %1 {offsets = [0, 38], sizes = [4, 384], strides = [1, 1]} : vector<4x512xbf16> to vector<4x384xbf16>
    %c32 = arith.constant 32 : index
    %c0_11 = arith.constant 0 : index
    %19 = vector.load %arg7[%c32, %c0_11] : memref<36x384xbf16, #tpu.memory_space<vmem>>, vector<4x384xbf16>
    tpu.vector_store %arg7[%c32, %c0_11], %18 {strides = array<i32>} : memref<36x384xbf16, #tpu.memory_space<vmem>>, vector<4x384xbf16>,
    %c0_12 = arith.constant 0 : index
    %c0_13 = arith.constant 0 : index
    %20 = vector.load %arg2[%c0_12, %c0_13] : memref<8x36xbf16, #tpu.memory_space<vmem>>, vector<8x36xbf16>
    %c0_14 = arith.constant 0 : index
    %c0_15 = arith.constant 0 : index
    %21 = vector.load %arg7[%c0_14, %c0_15] : memref<36x384xbf16, #tpu.memory_space<vmem>>, vector<36x384xbf16>
    %cst = arith.constant dense<0.000000e+00> : vector<8x384xf32>
    %22 = tpu.matmul %20, %21, %cst {dimension_numbers = #tpu.dot_dimension_numbers<[1], [0], [0], [1], [0, 0, 1, 1], [], []>} : vector<8x36xbf16>, vector<36x384xbf16>, vector<8x384xf32> -> vector<8x384xf32>
    %c0_16 = arith.constant 0 : index
    %c0_17 = arith.constant 0 : index
    %23 = vector.load %arg4[%c0_16, %c0_17] : memref<8x384xf32, #tpu.memory_space<vmem>>, vector<8x384xf32>
    %24 = arith.addf %23, %22 : vector<8x384xf32>
    %c0_18 = arith.constant 0 : index
    %c0_19 = arith.constant 0 : index
    %25 = vector.load %arg3[%c0_18, %c0_19] : memref<8x1xf32, #tpu.memory_space<vmem>>, vector<8x1xf32>
    %26 = vector.broadcast %25 : vector<8x1xf32> to vector<8x384xf32>
    %27 = arith.addf %24, %26 : vector<8x384xf32>
    %cst_20 = arith.constant 1.000000e+00 : f32
    %28 = vector.broadcast %cst_20 : f32 to vector<8x384xf32>
    %29 = arith.cmpf oge, %27, %28 : vector<8x384xf32>
    %30 = arith.extui %29 : vector<8x384xi1> to vector<8x384xi32>
    %31 = arith.sitofp %30 : vector<8x384xi32> to vector<8x384xf32>
    %cst_21 = arith.constant -1.000000e+02 : f32
    %32 = vector.broadcast %cst_21 : f32 to vector<8x384xf32>
    %33 = arith.cmpf ole, %27, %32 : vector<8x384xf32>
    %34 = arith.extui %33 : vector<8x384xi1> to vector<8x384xi32>
    %35 = arith.sitofp %34 : vector<8x384xi32> to vector<8x384xf32>
    %36 = arith.subf %27, %31 : vector<8x384xf32>
    %cst_22 = arith.constant 1.000000e+02 : f32
    %37 = vector.broadcast %cst_22 : f32 to vector<8x384xf32>
    %38 = arith.mulf %35, %37 : vector<8x384xf32>
    %39 = arith.addf %36, %38 : vector<8x384xf32>
    %c0_23 = arith.constant 0 : index
    %c0_24 = arith.constant 0 : index
    %40 = vector.load %arg5[%c0_23, %c0_24] : memref<8x384xf32, #tpu.memory_space<vmem>>, vector<8x384xf32>
    tpu.vector_store %arg5[%c0_23, %c0_24], %39 {strides = array<i32>} : memref<8x384xf32, #tpu.memory_space<vmem>>, vector<8x384xf32>,
    %41 = arith.subf %31, %35 : vector<8x384xf32>
    %42 = arith.truncf %41 : vector<8x384xf32> to vector<8x384xbf16>
    %c0_25 = arith.constant 0 : index
    %c0_26 = arith.constant 0 : index
    %43 = vector.load %arg6[%c0_25, %c0_26] : memref<8x384xbf16, #tpu.memory_space<vmem>>, vector<8x384xbf16>
    tpu.vector_store %arg6[%c0_25, %c0_26], %42 {strides = array<i32>} : memref<8x384xbf16, #tpu.memory_space<vmem>>, vector<8x384xbf16>,
    return
  }
  func.func @transform_0(%arg0: i32) -> (i32, i32, i32) {
    %c0_i32 = arith.constant 0 : i32
    %c0_i32_0 = arith.constant 0 : i32
    %c0_i32_1 = arith.constant 0 : i32
    return %arg0, %c0_i32, %c0_i32_0 : i32, i32, i32
  }
  func.func @transform_1(%arg0: i32) -> (i32, i32) {
    %c0_i32 = arith.constant 0 : i32
    %c0_i32_0 = arith.constant 0 : i32
    %c0_i32_1 = arith.constant 0 : i32
    return %c0_i32, %c0_i32_0 : i32, i32
  }
  func.func @transform_2(%arg0: i32) -> (i32, i32) {
    %c0_i32 = arith.constant 0 : i32
    %c0_i32_0 = arith.constant 0 : i32
    %c0_i32_1 = arith.constant 0 : i32
    return %c0_i32, %c0_i32_0 : i32, i32
  }
  func.func @transform_3(%arg0: i32) -> (i32, i32) {
    %c0_i32 = arith.constant 0 : i32
    %c0_i32_0 = arith.constant 0 : i32
    return %c0_i32, %arg0 : i32, i32
  }
  func.func @transform_4(%arg0: i32) -> (i32, i32) {
    %c0_i32 = arith.constant 0 : i32
    %c0_i32_0 = arith.constant 0 : i32
    return %c0_i32, %arg0 : i32, i32
  }
  func.func @transform_5(%arg0: i32) -> (i32, i32) {
    %c0_i32 = arith.constant 0 : i32
    %c0_i32_0 = arith.constant 0 : i32
    return %c0_i32, %arg0 : i32, i32
  }
}

</mosaic_0001>

<llo_original>
// kernel: spiking_conv_forward.1
$region0: #{spiking_conv_forward.1}
  #allocation0 [shape = 'u32[]', space=smem, size = 0x4, offset = 0x4, fixed_abs, tag = 'smem constant byte address 0x4 - core index']
  #allocation1 [shape = 'u32[144,128]{1,0:T(1,128)}', space=vmem, size = 0x12000, scoped, tag = 'internal scratch']
  #allocation2 [shape = 'bf16[36,384]{1,0:T(8,128)(2,1)}', space=vmem, size = 0x7800, scoped, tag = 'scratch operand']
  %s0 = inlined_call_operand.vmem [shape: bf16[2,4,512], index: 0, kind: input, shape index: {}]
  %s1 = inlined_call_operand.vmem [shape: bf16[8,36], index: 1, kind: input, shape index: {}]
  %s2 = inlined_call_operand.vmem [shape: f32[8,1], index: 2, kind: input, shape index: {}]
  %s3 = inlined_call_operand.vmem [shape: f32[8,768], index: 3, kind: input, shape index: {}, may-alias: {3,4}]
  %s4 = inlined_call_operand.vmem [shape: f32[8,768], index: 4, kind: output, shape index: {0}, may-alias: {3,4}]
  %s5 = inlined_call_operand.hbm [shape: bf16[8,768], index: 5, kind: output, shape index: {1}]
  %6 = xla_tuple %s4, %s5
  %s7 = sld [smem:[#allocation0]]
  $region57: #{spiking_conv_forward.1} parent=0
    _
  %s9 = ssub.s32 1, %s7
  %s10 = scalar_select 0, %s9, %s7
  $region1: #{spiking_conv_forward.1} parent=0
    #allocation3 [shape = 'u8[12288]{0}', space=vmem, size = 0x3000, scoped, tag = 'output window, operand 1']
    #allocation4 [shape = 's32[2]{0}', space=sflag, size = 0x8, scoped, tag = 'scoped memory for spiking_conv_forward.1']
    %11 = vsyncpa [#allocation4], 0
    %s12 = scalar_lea.sflag [#allocation4], 1
    %13 = vsyncpa %s12, 0
    loop: start=0, step=1, limit=4
    $region2: #{spiking_conv_forward.1} parent=1 // loop_pre_header
      _
    $region3: #{spiking_conv_forward.1} parent=1 // loop_header
      %s15 = sphi 0, %s19
      %p16 = scmp.ge.s32.totalorder %s15, 4
      %s25 = sphi 0, %s27
      %s28 = sphi 0, %s25
      %s29 = sphi 0, %s28
      %s45 = sphi 0, %s29
      %s49 = sphi 0, %s49
      %s51 = sphi 0, %s49
      %s52 = sphi 0, %s51
      %s66 = sphi 0, %s52
      %s70 = sphi 0, %s70
      %s72 = sphi 0, %s70
      %s73 = sphi 0, %s72
      %s87 = sphi 0, %s73
      %s93 = sphi 0, %s95
      %s96 = sphi 0, %s93
      %s97 = sphi 0, %s96
      %s113 = sphi 0, %s97
      %s119 = sphi 0, %s121
      %s122 = sphi 0, %s119
      %s123 = sphi 0, %s122
      %s139 = sphi 0, %s123
      %s145 = sphi 0, %s147
      %s148 = sphi 0, %s145
      %s149 = sphi 0, %s148
      %s165 = sphi 0, %s149
    $region4: #{spiking_conv_forward.1} parent=1 // loop_header_branch
      %18 = sbr.rel (%p16) target = $region8
    $region5: #{spiking_conv_forward.1} parent=1 // loop_body
      %s20 = ssub.s32 %s15, 1
      %s21 = ssub.s32 %s15, 2
      %s22 = sadd.s32 %s15, 1
      %s23 = ssub.s32 %s15, %s22
      %p24 = scmp.eq.s32.totalorder %s23, 0
      %s26 = sadd.s32 %s25, 1
      %s27 = scalar_select %p24, %s25, %s26
      %p30 = pneg %p24
      %p31 = scmp.eq.s32.totalorder %s15, 1
      %p32 = por %p30, %p31
      %p33 = scmp.ne.s32.totalorder %s25, %s28
      %p34 = scmp.eq.s32.totalorder %s15, 0
      %p35 = por %p33, %p34
      %p36 = scmp.ne.s32.totalorder %s25, %s28
      %p37 = scmp.eq.s32.totalorder %s20, 1
      %p38 = por %p36, %p37
      %p39 = scmp.ne.s32.totalorder %s28, %s29
      %p40 = scmp.eq.s32.totalorder %s20, 0
      %p41 = por %p39, %p40
      %p42 = scmp.ne.s32.totalorder %s28, %s29
      %p43 = scmp.eq.s32.totalorder %s21, 1
      %p44 = por %p42, %p43
      %p46 = scmp.ne.s32.totalorder %s29, %s45
      %p47 = scmp.eq.s32.totalorder %s21, 0
      %p48 = por %p46, %p47
      %s50 = sadd.s32 %s49, 1
      %p53 = scmp.eq.s32.totalorder %s15, 1
      %p54 = scmp.ne.s32.totalorder %s49, %s51
      %p55 = scmp.eq.s32.totalorder %s15, 0
      %p56 = por %p54, %p55
      %p57 = scmp.ne.s32.totalorder %s49, %s51
      %p58 = scmp.eq.s32.totalorder %s20, 1
      %p59 = por %p57, %p58
      %p60 = scmp.ne.s32.totalorder %s51, %s52
      %p61 = scmp.eq.s32.totalorder %s20, 0
      %p62 = por %p60, %p61
      %p63 = scmp.ne.s32.totalorder %s51, %s52
      %p64 = scmp.eq.s32.totalorder %s21, 1
      %p65 = por %p63, %p64
      %p67 = scmp.ne.s32.totalorder %s52, %s66
      %p68 = scmp.eq.s32.totalorder %s21, 0
      %p69 = por %p67, %p68
      %s71 = sadd.s32 %s70, 1
      %p74 = scmp.eq.s32.totalorder %s15, 1
      %p75 = scmp.ne.s32.totalorder %s70, %s72
      %p76 = scmp.eq.s32.totalorder %s15, 0
      %p77 = por %p75, %p76
      %p78 = scmp.ne.s32.totalorder %s70, %s72
      %p79 = scmp.eq.s32.totalorder %s20, 1
      %p80 = por %p78, %p79
      %p81 = scmp.ne.s32.totalorder %s72, %s73
      %p82 = scmp.eq.s32.totalorder %s20, 0
      %p83 = por %p81, %p82
      %p84 = scmp.ne.s32.totalorder %s72, %s73
      %p85 = scmp.eq.s32.totalorder %s21, 1
      %p86 = por %p84, %p85
      %p88 = scmp.ne.s32.totalorder %s73, %s87
      %p89 = scmp.eq.s32.totalorder %s21, 0
      %p90 = por %p88, %p89
      %s91 = ssub.s32 %s15, %s22
      %p92 = scmp.eq.s32.totalorder %s91, 0
      %s94 = sadd.s32 %s93, 1
      %s95 = scalar_select %p92, %s93, %s94
      %p98 = pneg %p92
      %p99 = scmp.eq.s32.totalorder %s15, 1
      %p100 = por %p98, %p99
      %p101 = scmp.ne.s32.totalorder %s93, %s96
      %p102 = scmp.eq.s32.totalorder %s15, 0
      %p103 = por %p101, %p102
      %p104 = scmp.ne.s32.totalorder %s93, %s96
      %p105 = scmp.eq.s32.totalorder %s20, 1
      %p106 = por %p104, %p105
      %p107 = scmp.ne.s32.totalorder %s96, %s97
      %p108 = scmp.eq.s32.totalorder %s20, 0
      %p109 = por %p107, %p108
      %p110 = scmp.ne.s32.totalorder %s96, %s97
      %p111 = scmp.eq.s32.totalorder %s21, 1
      %p112 = por %p110, %p111
      %p114 = scmp.ne.s32.totalorder %s97, %s113
      %p115 = scmp.eq.s32.totalorder %s21, 0
      %p116 = por %p114, %p115
      %s117 = ssub.s32 %s15, %s22
      %p118 = scmp.eq.s32.totalorder %s117, 0
      %s120 = sadd.s32 %s119, 1
      %s121 = scalar_select %p118, %s119, %s120
      %p124 = pneg %p118
      %p125 = scmp.eq.s32.totalorder %s15, 1
      %p126 = por %p124, %p125
      %p127 = scmp.ne.s32.totalorder %s119, %s122
      %p128 = scmp.eq.s32.totalorder %s15, 0
      %p129 = por %p127, %p128
      %p130 = scmp.ne.s32.totalorder %s119, %s122
      %p131 = scmp.eq.s32.totalorder %s20, 1
      %p132 = por %p130, %p131
      %p133 = scmp.ne.s32.totalorder %s122, %s123
      %p134 = scmp.eq.s32.totalorder %s20, 0
      %p135 = por %p133, %p134
      %p136 = scmp.ne.s32.totalorder %s122, %s123
      %p137 = scmp.eq.s32.totalorder %s21, 1
      %p138 = por %p136, %p137
      %p140 = scmp.ne.s32.totalorder %s123, %s139
      %p141 = scmp.eq.s32.totalorder %s21, 0
      %p142 = por %p140, %p141
      %s143 = ssub.s32 %s15, %s22
      %p144 = scmp.eq.s32.totalorder %s143, 0
      %s146 = sadd.s32 %s145, 1
      %s147 = scalar_select %p144, %s145, %s146
      %p150 = pneg %p144
      %p151 = scmp.eq.s32.totalorder %s15, 1
      %p152 = por %p150, %p151
      %p153 = scmp.ne.s32.totalorder %s145, %s148
      %p154 = scmp.eq.s32.totalorder %s15, 0
      %p155 = por %p153, %p154
      %p156 = scmp.ne.s32.totalorder %s145, %s148
      %p157 = scmp.eq.s32.totalorder %s20, 1
      %p158 = por %p156, %p157
      %p159 = scmp.ne.s32.totalorder %s148, %s149
      %p160 = scmp.eq.s32.totalorder %s20, 0
      %p161 = por %p159, %p160
      %p162 = scmp.ne.s32.totalorder %s148, %s149
      %p163 = scmp.eq.s32.totalorder %s21, 1
      %p164 = por %p162, %p163
      %p166 = scmp.ne.s32.totalorder %s149, %s165
      %p167 = scmp.eq.s32.totalorder %s21, 0
      %p168 = por %p166, %p167
      %p169 = scmp.le.s32.totalorder 1, %s15
      %p170 = scmp.lt.s32.totalorder %s15, 3
      %p171 = pnand %p169, %p170
      %p172 = pneg %p171
      // Predicated region
      $region9: #{spiking_conv_forward.1} parent=5 // pred_check
        _
      $region10: #{spiking_conv_forward.1} parent=5 // pred_check_branch
        %174 = sbr.rel (%p171) target = $region12
      $region11: #{spiking_conv_forward.1} parent=5 // pred_region
        %s175 = ssub.s32 %s15, 1
        // Predicated region
        $region13: #{spiking_conv_forward.1} parent=11 // pred_check
          %p176 = pneg %p62
        $region14: #{spiking_conv_forward.1} parent=11 // pred_check_branch
          %178 = sbr.rel (%p176) target = $region16
        $region15: #{spiking_conv_forward.1} parent=11 // pred_region
          _
        $region16: #{spiking_conv_forward.1} parent=11 // pred_fallthru
          _
        // Predicated region
        $region17: #{spiking_conv_forward.1} parent=11 // pred_check
          %p179 = pneg %p83
        $region18: #{spiking_conv_forward.1} parent=11 // pred_check_branch
          %181 = sbr.rel (%p179) target = $region20
        $region19: #{spiking_conv_forward.1} parent=11 // pred_region
          _
        $region20: #{spiking_conv_forward.1} parent=11 // pred_fallthru
          _
      $region12: #{spiking_conv_forward.1} parent=5 // pred_fallthru
        _
      %p182 = scmp.lt.s32.totalorder %s15, 2
      // Predicated region
      $region21: #{spiking_conv_forward.1} parent=5 // pred_check
        %p183 = pneg %p182
      $region22: #{spiking_conv_forward.1} parent=5 // pred_check_branch
        %185 = sbr.rel (%p183) target = $region24
      $region23: #{spiking_conv_forward.1} parent=5 // pred_region
        // Predicated region
        $region25: #{spiking_conv_forward.1} parent=23 // pred_check
          %p186 = pneg %p35
        $region26: #{spiking_conv_forward.1} parent=23 // pred_check_branch
          %188 = sbr.rel (%p186) target = $region28
        $region27: #{spiking_conv_forward.1} parent=23 // pred_region
          %p189 = scmp.lt.s32.totalorder %s15, 1
          %s190 = scalar_select %p189, %s15, 1
          %s191 = smul.addr %s190, 4
          %s192 = smul.addr %s191, 2
          %s193 = scalar_lea.vmem %s0, %s192
        $region28: #{spiking_conv_forward.1} parent=23 // pred_fallthru
          _
        // Predicated region
        $region29: #{spiking_conv_forward.1} parent=23 // pred_check
          %p194 = pneg %p103
        $region30: #{spiking_conv_forward.1} parent=23 // pred_check_branch
          %196 = sbr.rel (%p194) target = $region32
        $region31: #{spiking_conv_forward.1} parent=23 // pred_region
          %s197 = smul.u32 3, %s15
          %p198 = scmp.lt.s32.totalorder %s197, 5
          %s199 = scalar_select %p198, %s197, 5
          %s200 = smul.addr %s199, 8
          %s201 = scalar_lea.vmem %s3, %s200
          %s202 = smul.u32 3, %s15
        $region32: #{spiking_conv_forward.1} parent=23 // pred_fallthru
          _
      $region24: #{spiking_conv_forward.1} parent=5 // pred_fallthru
        _
      %p203 = scmp.le.s32.totalorder 1, %s15
      %p204 = scmp.lt.s32.totalorder %s15, 3
      %p205 = pnand %p203, %p204
      %p206 = pneg %p205
      // Predicated region
      $region33: #{spiking_conv_forward.1} parent=5 // pred_check
        _
      $region34: #{spiking_conv_forward.1} parent=5 // pred_check_branch
        %208 = sbr.rel (%p205) target = $region36
      $region35: #{spiking_conv_forward.1} parent=5 // pred_region
        %s209 = ssub.s32 %s15, 1
        %p210 = scmp.lt.s32.totalorder %s20, 1
        %s211 = scalar_select %p210, %s20, 1
        %s212 = smul.addr %s211, 4
        %s213 = smul.addr %s212, 2
        %s214 = scalar_lea.vmem %s0, %s213
        %p215 = pneg %p41
        %p216 = pneg %p38
        %p217 = pneg %p62
        %p218 = pneg %p59
        %p219 = pneg %p83
        %p220 = pneg %p80
        %s221 = smul.u32 3, %s20
        %p222 = scmp.lt.s32.totalorder %s221, 5
        %s223 = scalar_select %p222, %s221, 5
        %s224 = smul.addr %s223, 8
        %s225 = scalar_lea.vmem %s3, %s224
        %p226 = pneg %p109
        %p227 = pneg %p106
        %p228 = pneg %p135
        %p229 = pneg %p132
        %s230 = smul.u32 3, %s20
        %p231 = scmp.lt.s32.totalorder %s230, 5
        %s232 = scalar_select %p231, %s230, 5
        %s233 = smul.addr %s232, 8
        %s234 = scalar_lea.vmem %s4, %s233
        %p235 = pneg %p161
        %p236 = pneg %p158
        %s237 = sand.u32 %s148, 1
        %s238 = scalar_lea.sflag [#allocation4], %s237
        %s239 = sand.u32 %s148, 1
        %s240 = smul.addr %s239, 12
        %s241 = scalar_lea.vmem [#allocation3], %s240
        %p242 = scmp.lt.s32.totalorder %s20, 1
        %s243 = scalar_select %p242, %s20, 1
        %s244 = smul.addr %s243, 4
        %s245 = smul.addr %s244, 2
        %s246 = scalar_lea.vmem %s0, %s245
        %s247 = smul.u32 3, %s20
        %p248 = scmp.lt.s32.totalorder %s247, 5
        %s249 = scalar_select %p248, %s247, 5
        %s250 = smul.addr %s249, 8
        %s251 = scalar_lea.vmem %s3, %s250
        %s252 = smul.u32 3, %s20
        %s253 = smul.u32 3, %s20
        %p254 = scmp.lt.s32.totalorder %s253, 5
        %s255 = scalar_select %p254, %s253, 5
        %s256 = smul.addr %s255, 8
        %s257 = scalar_lea.vmem %s4, %s256
        %s258 = smul.u32 3, %s20
        %s259 = smul.u32 3, %s20
        %v261 = vld [vmem:[%s246] sm:$0xff]
        %v263 = vcombine.high %v261, %v261
        %v265 = vunpack.c.l.s4 1983009808
        %v266 = vunpack.c.0.s8 %v265
        %v267 = vlaneseq
        %v268 = vshrl.u32 %v267, 7
        %v269 = vsub.s32 %v266, %v268
        %v270 = vrot.slane %v261, %v269
        %v272 = vunpack.c.l.s4 1983009808
        %v273 = vunpack.c.0.s8 %v272
        %v274 = vlaneseq
        %v275 = vshrl.u32 %v274, 7
        %v276 = vsub.s32 %v273, %v275
        %v277 = vrot.slane %v263, %v276
        %280 = vst [vmem:[#allocation2] sm:$0x33] %v270
        %281 = vst [vmem:[#allocation2 + $0x8] sm:$0x3] %v277
        %v282 = vcombine.low %v261, %v261
        %v284 = vunpack.c.l.s4 1983009808
        %v285 = vunpack.c.0.s8 %v284
        %v286 = vlaneseq
        %v287 = vshrl.u32 %v286, 7
        %v288 = vsub.s32 %v285, %v287
        %v289 = vrot.slane %v282, %v288
        %290 = vrot.lane.b32.xlu0 %v289, 127
        %v291 = vpop.permute.xlu0 %290
        %292 = vrot.lane.b32.xlu0 %v270, 127
        %v293 = vpop.permute.xlu0 %292
        %v294 = vrot.slane %v291, 4
        %v295 = vrot.slane %v293, 4
        %vm296 = vcmask 1043456
        %v297 = vsel %vm296, %v294, %v295
        %vm298 = vcmask 1039360
        %v299 = vsel %vm298, %v291, %v297
        %v300 = vsel %vm298, %v293, %v295
        %303 = vst [vmem:[#allocation2] sm:$0xcc] %v299
        %304 = vst [vmem:[#allocation2 + $0x8] sm:$0xc] %v300
        %305 = vrot.lane.b32.xlu0 %v270, 126
        %v306 = vpop.permute.xlu0 %305
        %307 = vrot.lane.b32.xlu0 %v277, 126
        %v308 = vpop.permute.xlu0 %307
        %v309 = vrot.slane %v306, 4
        %v310 = vrot.slane %v308, 4
        %v311 = vsel %vm296, %v309, %v310
        %vm312 = vcmask 1031168
        %v313 = vsel %vm312, %v306, %v311
        %v314 = vsel %vm312, %v308, %v310
        %317 = vst [vmem:[#allocation2 + $0xc] sm:$0x33] %v313
        %318 = vst [vmem:[#allocation2 + $0x14] sm:$0x3] %v314
        %319 = vrot.lane.b32.xlu0 %v289, 110
        %v320 = vpop.permute.xlu0 %319
        %321 = vrot.lane.b32.xlu0 %v270, 110
        %v322 = vpop.permute.xlu0 %321
        %v323 = vrot.slane %v320, 4
        %v324 = vrot.slane %v322, 4
        %v325 = vsel %vm296, %v323, %v324
        %vm326 = vcmask 900096
        %v327 = vsel %vm326, %v320, %v325
        %v328 = vsel %vm326, %v322, %v324
        %331 = vst [vmem:[#allocation2 + $0xc] sm:$0xcc] %v327
        %332 = vst [vmem:[#allocation2 + $0x14] sm:$0xc] %v328
        %333 = vrot.lane.b32.xlu0 %v270, 109
        %v334 = vpop.permute.xlu0 %333
        %335 = vrot.lane.b32.xlu0 %v277, 109
        %v336 = vpop.permute.xlu0 %335
        %v337 = vrot.slane %v334, 4
        %v338 = vrot.slane %v336, 4
        %v339 = vsel %vm296, %v337, %v338
        %vm340 = vcmask 891904
        %v341 = vsel %vm340, %v334, %v339
        %v342 = vsel %vm340, %v336, %v338
        %345 = vst [vmem:[#allocation2 + $0x18] sm:$0x33] %v341
        %346 = vst [vmem:[#allocation2 + $0x20] sm:$0x3] %v342
        %347 = vrot.lane.b32.xlu0 %v289, 108
        %v348 = vpop.permute.xlu0 %347
        %349 = vrot.lane.b32.xlu0 %v270, 108
        %v350 = vpop.permute.xlu0 %349
        %v351 = vrot.slane %v348, 4
        %v352 = vrot.slane %v350, 4
        %v353 = vsel %vm296, %v351, %v352
        %vm354 = vcmask 883712
        %v355 = vsel %vm354, %v348, %v353
        %v356 = vsel %vm354, %v350, %v352
        %359 = vst [vmem:[#allocation2 + $0x18] sm:$0xcc] %v355
        %360 = vst [vmem:[#allocation2 + $0x20] sm:$0xc] %v356
        %361 = vrot.lane.b32.xlu0 %v270, 92
        %v362 = vpop.permute.xlu0 %361
        %363 = vrot.lane.b32.xlu0 %v277, 92
        %v364 = vpop.permute.xlu0 %363
        %v365 = vrot.slane %v362, 4
        %v366 = vrot.slane %v364, 4
        %v367 = vsel %vm296, %v365, %v366
        %vm368 = vcmask 752640
        %v369 = vsel %vm368, %v362, %v367
        %v370 = vsel %vm368, %v364, %v366
        %373 = vst [vmem:[#allocation2 + $0x24] sm:$0x33] %v369
        %374 = vst [vmem:[#allocation2 + $0x2c] sm:$0x3] %v370
        %375 = vrot.lane.b32.xlu0 %v289, 91
        %v376 = vpop.permute.xlu0 %375
        %377 = vrot.lane.b32.xlu0 %v270, 91
        %v378 = vpop.permute.xlu0 %377
        %v379 = vrot.slane %v376, 4
        %v380 = vrot.slane %v378, 4
        %v381 = vsel %vm296, %v379, %v380
        %vm382 = vcmask 744448
        %v383 = vsel %vm382, %v376, %v381
        %v384 = vsel %vm382, %v378, %v380
        %387 = vst [vmem:[#allocation2 + $0x24] sm:$0xcc] %v383
        %388 = vst [vmem:[#allocation2 + $0x2c] sm:$0xc] %v384
        %389 = vrot.lane.b32.xlu0 %v270, 90
        %v390 = vpop.permute.xlu0 %389
        %391 = vrot.lane.b32.xlu0 %v277, 90
        %v392 = vpop.permute.xlu0 %391
        %v393 = vrot.slane %v390, 4
        %v394 = vrot.slane %v392, 4
        %v395 = vsel %vm296, %v393, %v394
        %vm396 = vcmask 736256
        %v397 = vsel %vm396, %v390, %v395
        %v398 = vsel %vm396, %v392, %v394
        %401 = vst [vmem:[#allocation2 + $0x30] sm:$0x33] %v397
        %402 = vst [vmem:[#allocation2 + $0x38] sm:$0x3] %v398
        %v403 = vld [vmem:[%s1] sm:$0xf]
        %v404 = vld [vmem:[#allocation2] sm:$0xff]
        %v405 = vld [vmem:[#allocation2 + $0x8] sm:$0xf]
        %v406 = vld [vmem:[#allocation2 + $0xc] sm:$0xff]
        %v407 = vld [vmem:[#allocation2 + $0x14] sm:$0xf]
        %v408 = vld [vmem:[#allocation2 + $0x18] sm:$0xff]
        %v409 = vld [vmem:[#allocation2 + $0x20] sm:$0xf]
        %v410 = vld [vmem:[#allocation2 + $0x24] sm:$0xff]
        %v411 = vld [vmem:[#allocation2 + $0x2c] sm:$0xf]
        %v412 = vld [vmem:[#allocation2 + $0x30] sm:$0x33]
        %v413 = vld [vmem:[#allocation2 + $0x38] sm:$0x3]
        %v424 = vunpack.c.l.b16 %v404
        %v425 = vunpack.c.h.b16 %v404
        %v426 = vunpack.c.l.b16 %v405
        %v427 = vunpack.c.l.b16 %v406
        %v428 = vunpack.c.h.b16 %v406
        %v429 = vunpack.c.l.b16 %v407
        %v430 = vunpack.c.l.b16 %v408
        %v431 = vunpack.c.h.b16 %v408
        %v432 = vunpack.c.l.b16 %v409
        %v433 = vunpack.c.l.b16 %v410
        %v434 = vunpack.c.h.b16 %v410
        %v435 = vunpack.c.l.b16 %v411
        %v436 = vunpack.c.l.b16 %v412
        %v437 = vunpack.c.h.b16 %v412
        %v438 = vunpack.c.l.b16 %v413
        %v439 = vpack.c.b16 %v427, %v424
        %v440 = vpack.c.b16 %v428, %v425
        %v441 = vpack.c.b16 %v429, %v426
        %v442 = vpack.c.b16 %v433, %v430
        %v443 = vpack.c.b16 %v434, %v431
        %v444 = vpack.c.b16 %v435, %v432
        %v445 = vpack.c.b16 %v436, %v436
        %v446 = vpack.c.b16 %v437, %v437
        %v447 = vpack.c.b16 %v438, %v438
        %vm454 = vcmask 293888
        %v456 = vsel %vm454, %v403, 0
        %vm458 = vcmask 1041408
        %v460 = vsel %vm458, %v445, 0
        %v463 = vsel %vm458, %v446, 0
        %v466 = vsel %vm458, %v447, 0
        %468 = vmatprep.subr.bf16.mxu0 0
        %469 = vmatpush1.bf16.msra.mxu0 0
        %470 = vmatprep.subr.bf16.mxu0 0
        %471 = vmatpush1.bf16.msra.mxu0 0
        %472 = vmatprep.subr.bf16.mxu0 0
        %473 = vmatpush1.bf16.msra.mxu0 0
        %474 = vmatprep.subr.bf16.mxu0 0
        %475 = vmatpush1.bf16.msra.mxu0 0
        %476 = vmatprep.subr.bf16.mxu0 0
        %477 = vmatpush1.bf16.msra.mxu0 0
        %478 = vmatprep.subr.bf16.mxu0 %v463
        %479 = vmatpush1.bf16.msra.mxu0 %v460
        %480 = vmatprep.subr.bf16.mxu0 %v443
        %481 = vmatpush1.bf16.msra.mxu0 %v442
        %482 = vmatprep.subr.bf16.mxu0 %v440
        %483 = vmatpush1.bf16.msra.mxu0 %v439
        %484 = vmatprep.subr.bf16.mxu0 0
        %485 = vmatpush2.bf16.msra.mxu0 0
        %486 = vmatprep.subr.bf16.mxu0 0
        %487 = vmatpush2.bf16.msra.mxu0 0
        %488 = vmatprep.subr.bf16.mxu0 0
        %489 = vmatpush2.bf16.msra.mxu0 0
        %490 = vmatprep.subr.bf16.mxu0 0
        %491 = vmatpush2.bf16.msra.mxu0 0
        %492 = vmatprep.subr.bf16.mxu0 0
        %493 = vmatpush2.bf16.msra.mxu0 0
        %494 = vmatprep.subr.bf16.mxu0 0
        %495 = vmatpush2.bf16.msra.mxu0 0
        %496 = vmatprep.subr.bf16.mxu0 0
        %497 = vmatpush2.bf16.msra.mxu0 0
        %498 = vmatprep.subr.bf16.mxu0 0
        %499 = vmatpush2.bf16.msra.mxu0 0
        %500 = vmatprep.mubr.bf16.mxu0 0
        %501 = vmatmul.mubr.bf16.gmra.mxu0 %v456
        %v502 = vpop.f32.mrf.mxu0
        %v503 = vadd.f32 0.0, %v502
        %v504 = vpop.f32.mrf.mxu0
        %v505 = vadd.f32 0.0, %v504
        %v506 = vpop.f32.mrf.mxu0
        %v507 = vpop.f32.mrf.mxu0
        %508 = vdwg.mxu0
        %509 = vmatprep.subr.bf16.mxu0 0
        %510 = vmatpush1.bf16.msra.mxu0 0
        %511 = vmatprep.subr.bf16.mxu0 0
        %512 = vmatpush1.bf16.msra.mxu0 0
        %513 = vmatprep.subr.bf16.mxu0 0
        %514 = vmatpush1.bf16.msra.mxu0 0
        %515 = vmatprep.subr.bf16.mxu0 0
        %516 = vmatpush1.bf16.msra.mxu0 0
        %517 = vmatprep.subr.bf16.mxu0 0
        %518 = vmatpush1.bf16.msra.mxu0 0
        %519 = vmatprep.subr.bf16.mxu0 0
        %520 = vmatpush1.bf16.msra.mxu0 %v466
        %521 = vmatprep.subr.bf16.mxu0 0
        %522 = vmatpush1.bf16.msra.mxu0 %v444
        %523 = vmatprep.subr.bf16.mxu0 0
        %524 = vmatpush1.bf16.msra.mxu0 %v441
        %525 = vmatprep.subr.bf16.mxu0 0
        %526 = vmatpush2.bf16.msra.mxu0 0
        %527 = vmatprep.subr.bf16.mxu0 0
        %528 = vmatpush2.bf16.msra.mxu0 0
        %529 = vmatprep.subr.bf16.mxu0 0
        %530 = vmatpush2.bf16.msra.mxu0 0
        %531 = vmatprep.subr.bf16.mxu0 0
        %532 = vmatpush2.bf16.msra.mxu0 0
        %533 = vmatprep.subr.bf16.mxu0 0
        %534 = vmatpush2.bf16.msra.mxu0 0
        %535 = vmatprep.subr.bf16.mxu0 0
        %536 = vmatpush2.bf16.msra.mxu0 0
        %537 = vmatprep.subr.bf16.mxu0 0
        %538 = vmatpush2.bf16.msra.mxu0 0
        %539 = vmatprep.subr.bf16.mxu0 0
        %540 = vmatpush2.bf16.msra.mxu0 0
        %541 = vmatprep.mubr.bf16.mxu0 0
        %542 = vmatmul.mubr.bf16.gmra.mxu0 %v456
        %v543 = vpop.f32.mrf.mxu0
        %v544 = vadd.f32 0.0, %v543
        %v545 = vpop.f32.mrf.mxu0
        %v546 = vpop.f32.mrf.mxu0
        %v547 = vpop.f32.mrf.mxu0
        %548 = vdwg.mxu0
        %v549 = vld [vmem:[%s251] sm:$0xff]
        %v550 = vld [vmem:[%s251 + $0x8] sm:$0xff]
        %v551 = vld [vmem:[%s251 + $0x10] sm:$0xff]
        %v552 = vadd.f32 %v549, %v503
        %v553 = vadd.f32 %v550, %v505
        %v554 = vadd.f32 %v551, %v544
        %v555 = vld [vmem:[%s2] sm:$0xff]
        %557 = vset.pattern.permute.xlu0 0
        %558 = vperm.xlu0 %557, %v555
        %v559 = vpop.permute.xlu0 %558
        %v561 = vadd.f32 %v552, %v559
        %v562 = vadd.f32 %v553, %v559
        %v563 = vadd.f32 %v554, %v559
        %vm564 = vcmp.ge.f32.partialorder %v561, 1.0
        %vm565 = vcmp.ge.f32.partialorder %v562, 1.0
        %vm566 = vcmp.ge.f32.partialorder %v563, 1.0
        %v567 = vsel %vm564, 1, 0
        %v568 = vsel %vm565, 1, 0
        %v569 = vsel %vm566, 1, 0
        %v570 = vcvt.s32.f32 %v567
        %v571 = vcvt.s32.f32 %v568
        %v572 = vcvt.s32.f32 %v569
        %vm573 = vcmp.le.f32.partialorder %v561, -100.0
        %vm574 = vcmp.le.f32.partialorder %v562, -100.0
        %vm575 = vcmp.le.f32.partialorder %v563, -100.0
        %v576 = vsel %vm573, 1, 0
        %v577 = vsel %vm574, 1, 0
        %v578 = vsel %vm575, 1, 0
        %v579 = vcvt.s32.f32 %v576
        %v580 = vcvt.s32.f32 %v577
        %v581 = vcvt.s32.f32 %v578
        %v582 = vsub.f32 %v561, %v570
        %v583 = vsub.f32 %v562, %v571
        %v584 = vsub.f32 %v563, %v572
        %v585 = vmul.f32 %v579, 100.0
        %v586 = vmul.f32 %v580, 100.0
        %v587 = vmul.f32 %v581, 100.0
        %v588 = vadd.f32 %v582, %v585
        %v589 = vadd.f32 %v583, %v586
        %v590 = vadd.f32 %v584, %v587
        %591 = vst [vmem:[%s257] sm:$0xff] %v588
        %592 = vst [vmem:[%s257 + $0x8] sm:$0xff] %v589
        %593 = vst [vmem:[%s257 + $0x10] sm:$0xff] %v590
        %v594 = vsub.f32 %v570, %v579
        %v595 = vsub.f32 %v571, %v580
        %v596 = vsub.f32 %v572, %v581
        %v597 = vpack.c.bf16 %v594, %v594
        %v598 = vpack.c.bf16 %v595, %v595
        %v599 = vpack.c.bf16 %v596, %v596
        %v603 = vunpack.c.l.b16 %v597
        %v604 = vunpack.c.l.b16 %v598
        %v605 = vunpack.c.l.b16 %v599
        %v606 = vpack.c.b16 %v604, %v603
        %v607 = vpack.c.b16 %v605, %v605
        %610 = vst [vmem:[%s241] sm:$0xff] %v606
        %611 = vst [vmem:[%s241 + $0x8] sm:$0xf] %v607
        %s612 = smul.u32 3, %s20
        %p613 = scmp.lt.s32.totalorder %s612, 5
        %s614 = scalar_select %p613, %s612, 5
        %s615 = smul.addr %s614, 8
        %s616 = scalar_lea.vmem %s4, %s615
        %s617 = sand.u32 %s148, 1
        %s618 = scalar_lea.sflag [#allocation4], %s617
        %s619 = sand.u32 %s148, 1
        %s620 = smul.addr %s619, 12
        %s621 = scalar_lea.vmem [#allocation3], %s620
        // Predicated region
        $region37: #{spiking_conv_forward.1} parent=35 // pred_check
          %p622 = pneg %p132
        $region38: #{spiking_conv_forward.1} parent=35 // pred_check_branch
          %624 = sbr.rel (%p622) target = $region40
        $region39: #{spiking_conv_forward.1} parent=35 // pred_region
          %s625 = smul.u32 3, %s20
        $region40: #{spiking_conv_forward.1} parent=35 // pred_fallthru
          _
        // Predicated region
        $region41: #{spiking_conv_forward.1} parent=35 // pred_check
          %p626 = pneg %p158
        $region42: #{spiking_conv_forward.1} parent=35 // pred_check_branch
          %628 = sbr.rel (%p626) target = $region44
        $region43: #{spiking_conv_forward.1} parent=35 // pred_region
          %s629 = smul.u32 3, %s20
          %s631 = ssub.s32 192, 192
          %632 = vsyncadd %s618, %s631
          %s633 = smul.addr %s629, 64
          %s634 = scalar_lea.hbm %s5, %s633
          %s636 = sshll.u32 %s621, 4
          %s637 = int_to_ptr.vmem [resolvable:$true] %s636
          %639 = dma.vmem_to_hbm [thread:$0]  %s637, 192, %s634, %s618
        $region44: #{spiking_conv_forward.1} parent=35 // pred_fallthru
          _
      $region36: #{spiking_conv_forward.1} parent=5 // pred_fallthru
        _
      %p640 = scmp.le.s32.totalorder 2, %s15
      // Predicated region
      $region45: #{spiking_conv_forward.1} parent=5 // pred_check
        %p641 = pneg %p640
      $region46: #{spiking_conv_forward.1} parent=5 // pred_check_branch
        %643 = sbr.rel (%p641) target = $region48
      $region47: #{spiking_conv_forward.1} parent=5 // pred_region
        %s644 = ssub.s32 %s15, 2
        // Predicated region
        $region49: #{spiking_conv_forward.1} parent=47 // pred_check
          %p645 = pneg %p138
        $region50: #{spiking_conv_forward.1} parent=47 // pred_check_branch
          %647 = sbr.rel (%p645) target = $region52
        $region51: #{spiking_conv_forward.1} parent=47 // pred_region
          %s648 = smul.u32 3, %s21
          %p649 = scmp.lt.s32.totalorder %s648, 5
          %s650 = scalar_select %p649, %s648, 5
          %s651 = smul.addr %s650, 8
          %s652 = scalar_lea.vmem %s4, %s651
        $region52: #{spiking_conv_forward.1} parent=47 // pred_fallthru
          _
        // Predicated region
        $region53: #{spiking_conv_forward.1} parent=47 // pred_check
          %p653 = pneg %p164
        $region54: #{spiking_conv_forward.1} parent=47 // pred_check_branch
          %655 = sbr.rel (%p653) target = $region56
        $region55: #{spiking_conv_forward.1} parent=47 // pred_region
          %s656 = sand.u32 %s149, 1
          %s657 = scalar_lea.sflag [#allocation4], %s656
          %s658 = sand.u32 %s149, 1
          %s659 = smul.addr %s658, 12
          %s660 = scalar_lea.vmem [#allocation3], %s659
          %661 = dma.done %s657, 192
        $region56: #{spiking_conv_forward.1} parent=47 // pred_fallthru
          _
      $region48: #{spiking_conv_forward.1} parent=5 // pred_fallthru
        _
    $region6: #{spiking_conv_forward.1} parent=1 // loop_footer
      %s19 = sadd.s32 1, %s15
    $region7: #{spiking_conv_forward.1} parent=1 // loop_footer_branch
      %14 = sbr.rel target = $region3
    $region8: #{spiking_conv_forward.1} parent=1 // loop_exit
      _
    %662 = vsyncpa [#allocation4], 1
    %s663 = scalar_lea.sflag [#allocation4], 1
    %664 = vsyncpa %s663, 1

</llo_original>
